<compile_context>
chip_gen: v5e
topology: v5e:2x2
jax: 0.10.0
libtpu: 0.0.40
codegen_flags: <defaults>
</compile_context>

<pallas_src>
import jax
import jax.numpy as jnp
import numpy as np
from jax.experimental import pallas as pl
from jax.experimental.pallas import tpu as pltpu


def _round_up(x, m):
    return ((x + m - 1) // m) * m


def temporal_attention_kernel(x_ref, watt_ref, batt_ref, w1t_ref, b1_ref, o_ref):
    # x_ref:   (BT, T, C)   input tile (native dtype; upcast in-kernel)
    # watt_ref:(1, C)        conv1d weight pre-scaled by 1/64 (lane-dense)
    # batt_ref:(1,)          SMEM scalar: b_att - 2*sum(w_att)
    # w1t_ref: (C, NC_pad)   fc1 weight^T / 64, zero-padded columns
    # b1_ref:  (1, NC_pad)   b1 - 2*rowsum(W1), zero-padded
    # o_ref:   (BT, NC_pad)  lane-dense output tile
    x = x_ref[...].astype(jnp.float32)                          # (BT, T, C)

    # Conv1d(in=C, out=1, k=1) with the affine prescale folded host-side:
    # VPU multiply + XLU lane reduce; MXU left free for fc1.
    w_row = watt_ref[...].reshape(1, 1, -1)                     # (1, 1, C)
    logits = jnp.sum(x * w_row, axis=-1, keepdims=True) + batt_ref[0]   # (BT, T, 1)
    sig = jax.nn.sigmoid(logits)                                # (BT, T, 1) EUP

    # Attention-weighted temporal pooling on raw x (no (BT,T,C) f32 temp for
    # the scaled input):   pooled = Sx/(64*den) - 2   (fold finished below).
    sx = jnp.sum(x * sig, axis=1)                               # (BT, C)
    den = jnp.sum(sig, axis=1)                                  # (BT, 1)

    # fc1 on the MXU with M=BT:
    #   out = (Sx @ W1^T/64) * (1/den) + (b1 - 2*rowsum(W1))
    acc = jnp.dot(sx, w1t_ref[...], preferred_element_type=jnp.float32)  # (BT, NC_pad)
    # Exact reciprocal (VPU divide) of a (BT, 1) vector -- negligible cost;
    # approx=True (EUP estimate) is avoided to keep the 1e-4 check safe.
    inv_den = pl.reciprocal(den, approx=False)
    o_ref[...] = acc * inv_den + b1_ref[...]


def prepare_params(w_att, b_att, w1, b1):
    """Fold the affine prescale (x/64 - 2) into the weights ONCE at init.

    w_att: (C, 1) Conv1d(k=1) weight; b_att: (1, 1) bias; w1: (NC, C) Linear
    weight (PyTorch layout); b1: (NC,).  Returns a dict of prepared arrays."""
    w_att = jnp.asarray(w_att, jnp.float32).reshape(-1)          # (C,)
    b_att = jnp.asarray(b_att, jnp.float32).reshape(-1)[0]       # scalar
    w1 = jnp.asarray(w1, jnp.float32)                            # (NC, C)
    b1 = jnp.asarray(b1, jnp.float32).reshape(-1)                # (NC,)
    C = w_att.shape[0]
    NC = w1.shape[0]
    NC_pad = _round_up(NC, 128)                                  # lane-dense output width

    w_att_row = (w_att / 64.0).reshape(1, C)                     # (1, C)
    b_att_eff = (b_att - 2.0 * jnp.sum(w_att)).reshape(1)        # (1,) SMEM scalar
    w1t_pad = jnp.zeros((C, NC_pad), jnp.float32).at[:, :NC].set(w1.T / 64.0)
    b1_pad = jnp.zeros((1, NC_pad), jnp.float32).at[:, :NC].set(
        b1 - 2.0 * jnp.sum(w1, axis=1))
    return {"w_att_row": w_att_row, "b_att_eff": b_att_eff,
            "w1t": w1t_pad, "b1": b1_pad, "nc": NC}


def _vmem_limit_bytes():
    try:
        cap = int(pltpu.get_tpu_info().vmem_capacity_bytes)
    except Exception:
        cap = 64 << 20                     # conservative fallback (v7x physical VMEM)
    return int(min(cap * 3 // 4, 96 << 20))


def _choose_batch_tile(B, T, C, NC_pad, vmem_limit):
    """Largest batch tile fitting the VMEM budget, keeping >=2 grid steps for
    v7x megacore and ~4 steps for DMA/compute overlap when the batch allows."""
    if B <= 8:
        return B                                   # single full-batch block, grid=(1,)
    x_row = T * C * 4                              # f32 bytes per batch row of x
    out_row = NC_pad * 4
    weight_bytes = 2 * (C * NC_pad + NC_pad + C) * 4
    budget = max(vmem_limit - weight_bytes - (2 << 20), 1 << 20)
    # 2 pipeline buffers for x + 1 f32 compute temporary + 2 output buffers.
    bt = budget // (3 * x_row + 2 * out_row)
    bt = min(bt, 2048, (B // 8) * 8)
    if B >= 64:
        bt = min(bt, _round_up(pl.cdiv(B, 4), 8))  # >= ~4 pipeline steps
    elif B >= 16:
        bt = min(bt, _round_up(pl.cdiv(B, 2), 8))  # >= 2 steps (v7x megacore)
    return max(8, (int(bt) // 8) * 8)


def temporal_attention_bias(x, length, params):
    """x: (B, T, C) (layout before the module's transpose(2,1)), any dtype
    (upcast in-kernel); length: (B,) unused; params: from prepare_params().
    Returns (B, NC) float32."""
    del length                                     # unused in the reference forward
    B, T, C = x.shape
    w1t = params["w1t"]
    NC_pad = w1t.shape[1]
    NC = params["nc"]

    vmem_limit = _vmem_limit_bytes()
    BT = _choose_batch_tile(B, T, C, NC_pad, vmem_limit)
    grid = pl.cdiv(B, BT)
    # TODO(synk): if T is ever far from a multiple of 8, repack x as (B*T, C)
    # 2D blocks to avoid sublane padding of the T dim (no-op for T=8).

    # Advisory cost estimate for the XLA scheduler.
    flops = int(B * (4 * T * C + 2 * C * NC_pad + 2 * NC_pad))
    bytes_accessed = int(x.size * x.dtype.itemsize
                         + (w1t.size + NC_pad + C + 1) * 4
                         + B * NC_pad * 4)
    cost = pl.CostEstimate(flops=flops,
                           transcendentals=int(B * (T + 1)),
                           bytes_accessed=bytes_accessed)

    out = pl.pallas_call(
        temporal_attention_kernel,
        out_shape=jax.ShapeDtypeStruct((B, NC_pad), jnp.float32),
        grid_spec=pltpu.PrefetchScalarGridSpec(
            num_scalar_prefetch=0,
            grid=(grid,),
            in_specs=[
                pl.BlockSpec((BT, T, C), lambda b: (b, 0, 0)),       # x batch tile (ragged last block OK)
                pl.BlockSpec((1, C), lambda b: (0, 0)),              # conv1d weight (VMEM resident)
                pl.BlockSpec(memory_space=pltpu.MemorySpace.SMEM),   # folded conv1d bias scalar
                pl.BlockSpec((C, NC_pad), lambda b: (0, 0)),         # fc1 weight (VMEM resident)
                pl.BlockSpec((1, NC_pad), lambda b: (0, 0)),         # fc1 bias (VMEM resident)
            ],
            out_specs=pl.BlockSpec((BT, NC_pad), lambda b: (b, 0)),
        ),
        compiler_params=pltpu.CompilerParams(
            dimension_semantics=("parallel",),
            vmem_limit_bytes=vmem_limit),
        cost_estimate=cost,
    )(x, params["w_att_row"], params["b_att_eff"], w1t, params["b1"])
    return out[:, :NC]


def reference_forward(x, w_att, b_att, w1, b1):
    """Pure-JAX reference mirroring the PyTorch forward (x in (B, T, C))."""
    out = x.astype(jnp.float32) / 64.0 - 2.0                       # (B, T, C)
    logits = jnp.einsum('btc,c->bt', out, w_att[:, 0]) + b_att[0, 0]
    att = jax.nn.sigmoid(logits)                                   # (B, T)
    num = jnp.einsum('btc,bt->bc', out, att)                       # (B, C)
    den = jnp.sum(att, axis=1, keepdims=True)                      # (B, 1)
    pooled = num / den
    return pooled @ w1.T + b1                                      # (B, NC)


if __name__ == "__main__":
    # Small shapes consistent with the module: channels C=128, classes NC=29,
    # batch B=2, sequence length T=8.
    B, T, C, NC = 2, 8, 128, 29

    key = jax.random.PRNGKey(0)
    k1, k2, k3, k4, k5 = jax.random.split(key, 5)

    # Deterministic synthetic parameters (shapes match nn.Conv1d / nn.Linear).
    w_att = jax.random.normal(k1, (C, 1), jnp.float32) * 0.05   # Conv1d weight (1, C, 1) -> (C, 1)
    b_att = jax.random.normal(k2, (1, 1), jnp.float32) * 0.05   # Conv1d bias (1,) -> (1, 1)
    w1 = jax.random.normal(k3, (NC, C), jnp.float32) * 0.05     # Linear weight (out, in)
    b1 = jax.random.normal(k4, (NC,), jnp.float32) * 0.05       # Linear bias (out,)

    x = jax.random.uniform(k5, (B, T, C), jnp.float32, 0.0, 255.0)
    length = jnp.full((B,), T, jnp.float32)                     # unused by forward

    params = prepare_params(w_att, b_att, w1, b1)               # folded once at init
    out = temporal_attention_bias(x, length, params)
    out = jax.block_until_ready(out)

    ref = reference_forward(x, w_att, b_att, w1, b1)
    np.testing.assert_allclose(np.asarray(out), np.asarray(ref), rtol=1e-4, atol=1e-4)

    print("KERNEL_OK")
</pallas_src>

<mosaic_0001>
module attributes {stable_mosaic.version = 11 : i64} {
  func.func @temporal_attention_kernel(%arg0: i32, %arg1: memref<2x8x128xf32, #tpu.memory_space<vmem>>, %arg2: memref<1x128xf32, #tpu.memory_space<vmem>>, %arg3: memref<1xf32, #tpu.memory_space<smem>>, %arg4: memref<128x128xf32, #tpu.memory_space<vmem>>, %arg5: memref<1x128xf32, #tpu.memory_space<vmem>>, %arg6: memref<2x128xf32, #tpu.memory_space<vmem>>) attributes {dimension_semantics = [#tpu.dimension_semantics<parallel>], iteration_bounds = array<i64: 1>, scalar_prefetch = 0 : i64, scratch_operands = 0 : i64, tpu.core_type = #tpu.core_type<tc>, window_params = [{transform_indices = @transform_0, window_bounds = array<i64: 2, 8, 128>}, {pipeline_mode = #tpu.pipeline_mode<synchronous>, transform_indices = @transform_1, window_bounds = array<i64: 1, 128>}, {transform_indices = @transform_2, window_bounds = array<i64: 1>}, {pipeline_mode = #tpu.pipeline_mode<synchronous>, transform_indices = @transform_3, window_bounds = array<i64: 128, 128>}, {pipeline_mode = #tpu.pipeline_mode<synchronous>, transform_indices = @transform_4, window_bounds = array<i64: 1, 128>}, {transform_indices = @transform_5, window_bounds = array<i64: 2, 128>}]} {
    %c0 = arith.constant 0 : index
    %c0_0 = arith.constant 0 : index
    %c0_1 = arith.constant 0 : index
    %0 = vector.load %arg1[%c0, %c0_0, %c0_1] : memref<2x8x128xf32, #tpu.memory_space<vmem>>, vector<2x8x128xf32>
    %c0_2 = arith.constant 0 : index
    %c0_3 = arith.constant 0 : index
    %1 = vector.load %arg2[%c0_2, %c0_3] : memref<1x128xf32, #tpu.memory_space<vmem>>, vector<1x128xf32>
    %2 = vector.shape_cast %1 : vector<1x128xf32> to vector<1x1x128xf32>
    %3 = vector.broadcast %2 : vector<1x1x128xf32> to vector<2x8x128xf32>
    %4 = arith.mulf %0, %3 : vector<2x8x128xf32>
    %cst = arith.constant dense<0.000000e+00> : vector<2x8xf32>
    %5 = vector.multi_reduction <add>, %4, %cst [2] : vector<2x8x128xf32> to vector<2x8xf32>
    %6 = vector.shape_cast %5 : vector<2x8xf32> to vector<2x8x1xf32>
    %c0_4 = arith.constant 0 : index
    %7 = memref.load %arg3[%c0_4] : memref<1xf32, #tpu.memory_space<smem>>
    %8 = vector.broadcast %7 : f32 to vector<2x8x1xf32>
    %9 = arith.addf %6, %8 : vector<2x8x1xf32>
    %10 = arith.negf %9 : vector<2x8x1xf32>
    %11 = math.exp %10 : vector<2x8x1xf32>
    %cst_5 = arith.constant 1.000000e+00 : f32
    %12 = vector.broadcast %cst_5 : f32 to vector<2x8x1xf32>
    %13 = arith.addf %12, %11 : vector<2x8x1xf32>
    %14 = arith.divf %12, %13 : vector<2x8x1xf32>
    %15 = vector.broadcast %14 : vector<2x8x1xf32> to vector<2x8x128xf32>
    %16 = arith.mulf %0, %15 : vector<2x8x128xf32>
    %cst_6 = arith.constant dense<0.000000e+00> : vector<2x128xf32>
    %17 = vector.multi_reduction <add>, %16, %cst_6 [1] : vector<2x8x128xf32> to vector<2x128xf32>
    %cst_7 = arith.constant dense<0.000000e+00> : vector<2x1xf32>
    %18 = vector.multi_reduction <add>, %14, %cst_7 [1] : vector<2x8x1xf32> to vector<2x1xf32>
    %c0_8 = arith.constant 0 : index
    %c0_9 = arith.constant 0 : index
    %19 = vector.load %arg4[%c0_8, %c0_9] : memref<128x128xf32, #tpu.memory_space<vmem>>, vector<128x128xf32>
    %cst_10 = arith.constant dense<0.000000e+00> : vector<2x128xf32>
    %20 = tpu.matmul %17, %19, %cst_10 {dimension_numbers = #tpu.dot_dimension_numbers<[1], [0], [0], [1], [0, 0, 1, 1], [], []>} : vector<2x128xf32>, vector<128x128xf32>, vector<2x128xf32> -> vector<2x128xf32>
    %21 = tpu.reciprocal %18 : vector<2x1xf32> -> vector<2x1xf32>
    %22 = vector.broadcast %21 : vector<2x1xf32> to vector<2x128xf32>
    %23 = arith.mulf %20, %22 : vector<2x128xf32>
    %c0_11 = arith.constant 0 : index
    %c0_12 = arith.constant 0 : index
    %24 = vector.load %arg5[%c0_11, %c0_12] : memref<1x128xf32, #tpu.memory_space<vmem>>, vector<1x128xf32>
    %25 = vector.broadcast %24 : vector<1x128xf32> to vector<2x128xf32>
    %26 = arith.addf %23, %25 : vector<2x128xf32>
    %c0_13 = arith.constant 0 : index
    %c0_14 = arith.constant 0 : index
    %27 = vector.load %arg6[%c0_13, %c0_14] : memref<2x128xf32, #tpu.memory_space<vmem>>, vector<2x128xf32>
    tpu.vector_store %arg6[%c0_13, %c0_14], %26 {strides = array<i32>} : memref<2x128xf32, #tpu.memory_space<vmem>>, vector<2x128xf32>,
    return
  }
  func.func @transform_0(%arg0: i32) -> (i32, i32, i32) {
    %c0_i32 = arith.constant 0 : i32
    %c0_i32_0 = arith.constant 0 : i32
    %c0_i32_1 = arith.constant 0 : i32
    return %arg0, %c0_i32, %c0_i32_0 : i32, i32, i32
  }
  func.func @transform_1(%arg0: i32) -> (i32, i32) {
    %c0_i32 = arith.constant 0 : i32
    %c0_i32_0 = arith.constant 0 : i32
    %c0_i32_1 = arith.constant 0 : i32
    return %c0_i32, %c0_i32_0 : i32, i32
  }
  func.func @transform_2(%arg0: i32) -> i32 {
    %c0_i32 = arith.constant 0 : i32
    %c0_i32_0 = arith.constant 0 : i32
    return %c0_i32 : i32
  }
  func.func @transform_3(%arg0: i32) -> (i32, i32) {
    %c0_i32 = arith.constant 0 : i32
    %c0_i32_0 = arith.constant 0 : i32
    %c0_i32_1 = arith.constant 0 : i32
    return %c0_i32, %c0_i32_0 : i32, i32
  }
  func.func @transform_4(%arg0: i32) -> (i32, i32) {
    %c0_i32 = arith.constant 0 : i32
    %c0_i32_0 = arith.constant 0 : i32
    %c0_i32_1 = arith.constant 0 : i32
    return %c0_i32, %c0_i32_0 : i32, i32
  }
  func.func @transform_5(%arg0: i32) -> (i32, i32) {
    %c0_i32 = arith.constant 0 : i32
    %c0_i32_0 = arith.constant 0 : i32
    return %arg0, %c0_i32 : i32, i32
  }
}

</mosaic_0001>

<llo_original>
// kernel: tpu_custom_call.1
$region0: #{tpu_custom_call.1}
  #allocation0 [shape = 'u32[]', space=smem, size = 0x4, offset = 0x4, fixed_abs, tag = 'smem constant byte address 0x4 - core index']
  #allocation1 [shape = 'u32[72,128]{1,0:T(1,128)}', space=vmem, size = 0x9000, scoped, tag = 'internal scratch']
  #allocation2 [shape = 'f32[1]{0:T(128)S(6)}', space=smem, size = 0x200, scoped, tag = 'scoped memory for tpu_custom_call.1']
  %s0 = inlined_call_operand.hbm [shape: f32[2,8,128], index: 0, kind: input, shape index: {}]
  %s1 = inlined_call_operand.vmem [shape: f32[1,128], index: 1, kind: input, shape index: {}]
  %s2 = inlined_call_operand.<no memory space> [shape: f32[1], index: 2, kind: input, shape index: {}]
  %s3 = inlined_call_operand.hbm [shape: f32[128,128], index: 3, kind: input, shape index: {}]
  %s4 = inlined_call_operand.vmem [shape: f32[1,128], index: 4, kind: input, shape index: {}]
  %s5 = inlined_call_operand.hbm [shape: f32[2,128], index: 5, kind: output, shape index: {}]
  %s6 = sld [smem:[#allocation0]]
  $region38: #{tpu_custom_call.1} parent=0
    _
  %s8 = ssub.s32 1, %s6
  %s9 = scalar_select 0, %s8, %s6
  %10 = sst [smem:[#allocation2]] %s2
  $region1: #{tpu_custom_call.1} parent=0
    #allocation3 [shape = 'u8[8192]{0}', space=vmem, size = 0x2000, scoped, tag = 'input window, operand 0, single buffered']
    #allocation4 [shape = 's32[1]{0}', space=sflag, size = 0x4, scoped, tag = 'scoped memory for tpu_custom_call.1']
    #allocation5 [shape = 's32[1]{0}', space=sflag, size = 0x4, scoped, tag = 'scoped memory for tpu_custom_call.1']
    #allocation6 [shape = 'u8[65536]{0}', space=vmem, size = 0x10000, scoped, tag = 'input window, operand 3, single buffered']
    #allocation7 [shape = 's32[1]{0}', space=sflag, size = 0x4, scoped, tag = 'scoped memory for tpu_custom_call.1']
    #allocation8 [shape = 'u8[1024]{0}', space=vmem, size = 0x400, scoped, tag = 'output window, operand 0, single buffered']
    %11 = vsyncpa [#allocation4], 0
    %12 = vsyncpa [#allocation7], 0
    %13 = vsyncpa [#allocation5], 0
    // Predicated region
    $region2: #{tpu_custom_call.1} parent=1 // pred_check
      _
    $region3: #{tpu_custom_call.1} parent=1 // pred_check_branch
      %15 = sbr.rel (0) target = $region5
    $region4: #{tpu_custom_call.1} parent=1 // pred_region
      %17 = vsyncadd [#allocation4], 0
      %s18 = sshll.u32 %s0, 4
      %s19 = int_to_ptr.hbm [resolvable:$true] %s18
      %s20 = sshll.u32 [#allocation3], 4
      %s21 = int_to_ptr.vmem [resolvable:$true] %s20
      %26 = dma.hbm_to_vmem [thread:$0]  %s19, 256, %s21, [#allocation4], 128, 128, 8
    $region5: #{tpu_custom_call.1} parent=1 // pred_fallthru
      _
    // Predicated region
    $region6: #{tpu_custom_call.1} parent=1 // pred_check
      _
    $region7: #{tpu_custom_call.1} parent=1 // pred_check_branch
      %28 = sbr.rel (0) target = $region9
    $region8: #{tpu_custom_call.1} parent=1 // pred_region
      _
    $region9: #{tpu_custom_call.1} parent=1 // pred_fallthru
      _
    // Predicated region
    $region10: #{tpu_custom_call.1} parent=1 // pred_check
      _
    $region11: #{tpu_custom_call.1} parent=1 // pred_check_branch
      %30 = sbr.rel (0) target = $region13
    $region12: #{tpu_custom_call.1} parent=1 // pred_region
      _
    $region13: #{tpu_custom_call.1} parent=1 // pred_fallthru
      _
    // Predicated region
    $region14: #{tpu_custom_call.1} parent=1 // pred_check
      _
    $region15: #{tpu_custom_call.1} parent=1 // pred_check_branch
      %32 = sbr.rel (0) target = $region17
    $region16: #{tpu_custom_call.1} parent=1 // pred_region
      %34 = vsyncadd [#allocation7], 0
      %s35 = sshll.u32 %s3, 4
      %s36 = int_to_ptr.hbm [resolvable:$true] %s35
      %s37 = sshll.u32 [#allocation6], 4
      %s38 = int_to_ptr.vmem [resolvable:$true] %s37
      %43 = dma.hbm_to_vmem [thread:$0]  %s36, 2048, %s38, [#allocation7], 128, 128, 8
    $region17: #{tpu_custom_call.1} parent=1 // pred_fallthru
      _
    // Predicated region
    $region18: #{tpu_custom_call.1} parent=1 // pred_check
      _
    $region19: #{tpu_custom_call.1} parent=1 // pred_check_branch
      %45 = sbr.rel (0) target = $region21
    $region20: #{tpu_custom_call.1} parent=1 // pred_region
      _
    $region21: #{tpu_custom_call.1} parent=1 // pred_fallthru
      _
    // Predicated region
    $region22: #{tpu_custom_call.1} parent=1 // pred_check
      _
    $region23: #{tpu_custom_call.1} parent=1 // pred_check_branch
      %47 = sbr.rel (0) target = $region25
    $region24: #{tpu_custom_call.1} parent=1 // pred_region
      %49 = dma.done [#allocation4], 256
    $region25: #{tpu_custom_call.1} parent=1 // pred_fallthru
      _
    // Predicated region
    $region26: #{tpu_custom_call.1} parent=1 // pred_check
      _
    $region27: #{tpu_custom_call.1} parent=1 // pred_check_branch
      %51 = sbr.rel (0) target = $region29
    $region28: #{tpu_custom_call.1} parent=1 // pred_region
      %53 = dma.done [#allocation7], 2048
    $region29: #{tpu_custom_call.1} parent=1 // pred_fallthru
      _
    %v54 = vld [vmem:[#allocation3] sm:$0xff]
    %v55 = vld [vmem:[#allocation3 + $0x8] sm:$0xff]
    %v56 = vld [vmem:[%s1] sm:$0x1]
    %v58 = vperm.slane %v56, 0
    %v60 = vmul.f32 %v54, %v58
    %v61 = vmul.f32 %v55, %v58
    %62 = vadd.xlane.f32.xlu0 %v60
    %v63 = vpop.xlane.xlu0 %62
    %64 = vadd.xlane.f32.xlu0 %v61
    %v65 = vpop.xlane.xlu0 %64
    %s66 = sld [smem:[#allocation2]]
    %v67 = vstv %s66
    %v68 = vadd.f32 %v63, %v67
    %v69 = vadd.f32 %v65, %v67
    %v70 = vxor.u32 %v68, 2147483648
    %v71 = vxor.u32 %v69, 2147483648
    %v72 = vmul.f32 %v70, 1.442695
    %v73 = vpow.pop %v72
    %v74 = vmul.f32 %v71, 1.442695
    %v75 = vpow.pop %v74
    %v76 = vadd.f32 %v73, 1.0
    %v77 = vadd.f32 %v75, 1.0
    %v78 = vrcp.pop %v76
    %v79 = vmul.f32 %v76, %v78
    %v80 = vsub.f32 1.0, %v79
    %v81 = vmul.f32 %v78, %v80
    %v82 = vadd.f32 %v78, %v81
    %vm83 = vweird.f32 %v76
    %vm84 = vweird.f32 %v78
    %vm85 = vmor %vm83, %vm84
    %v86 = vsel %vm85, %v78, %v82
    %v87 = vand.u32 2147483647, %v76
    %vm88 = vcmp.eq.f32.partialorder %v87, 8.507059e+37
    %v89 = vand.u32 %v76, 2147483648
    %v90 = vor.u32 1.1754944e-38, %v89
    %v91 = vsel %vm88, %v90, %v86
    %v92 = vmul.f32 1.0, %v91
    %v93 = vrcp.pop %v77
    %v94 = vmul.f32 %v77, %v93
    %v95 = vsub.f32 1.0, %v94
    %v96 = vmul.f32 %v93, %v95
    %v97 = vadd.f32 %v93, %v96
    %vm98 = vweird.f32 %v77
    %vm99 = vweird.f32 %v93
    %vm100 = vmor %vm98, %vm99
    %v101 = vsel %vm100, %v93, %v97
    %v102 = vand.u32 2147483647, %v77
    %vm103 = vcmp.eq.f32.partialorder %v102, 8.507059e+37
    %v104 = vand.u32 %v77, 2147483648
    %v105 = vor.u32 1.1754944e-38, %v104
    %v106 = vsel %vm103, %v105, %v101
    %v107 = vmul.f32 1.0, %v106
    %v108 = vmul.f32 %v54, %v92
    %v109 = vmul.f32 %v55, %v107
    %v110 = vrot.slane %v108, 4
    %v111 = vadd.f32 %v108, %v110
    %v112 = vrot.slane %v111, 2
    %v113 = vadd.f32 %v111, %v112
    %v114 = vrot.slane %v113, 1
    %v115 = vadd.f32 %v113, %v114
    %v116 = vrot.slane %v109, 4
    %v117 = vadd.f32 %v109, %v116
    %v118 = vrot.slane %v117, 2
    %v119 = vadd.f32 %v117, %v118
    %v120 = vrot.slane %v119, 1
    %v121 = vadd.f32 %v119, %v120
    %v122 = vrot.slane %v92, 4
    %v123 = vadd.f32 %v92, %v122
    %v124 = vrot.slane %v123, 2
    %v125 = vadd.f32 %v123, %v124
    %v126 = vrot.slane %v125, 1
    %v127 = vadd.f32 %v125, %v126
    %v128 = vrot.slane %v107, 4
    %v129 = vadd.f32 %v107, %v128
    %v130 = vrot.slane %v129, 2
    %v131 = vadd.f32 %v129, %v130
    %v132 = vrot.slane %v131, 1
    %v133 = vadd.f32 %v131, %v132
    %v134 = vld [vmem:[#allocation6] sm:$0xff]
    %v135 = vld [vmem:[#allocation6 + $0x8] sm:$0xff]
    %v136 = vld [vmem:[#allocation6 + $0x10] sm:$0xff]
    %v137 = vld [vmem:[#allocation6 + $0x18] sm:$0xff]
    %v138 = vld [vmem:[#allocation6 + $0x20] sm:$0xff]
    %v139 = vld [vmem:[#allocation6 + $0x28] sm:$0xff]
    %v140 = vld [vmem:[#allocation6 + $0x30] sm:$0xff]
    %v141 = vld [vmem:[#allocation6 + $0x38] sm:$0xff]
    %v142 = vld [vmem:[#allocation6 + $0x40] sm:$0xff]
    %v143 = vld [vmem:[#allocation6 + $0x48] sm:$0xff]
    %v144 = vld [vmem:[#allocation6 + $0x50] sm:$0xff]
    %v145 = vld [vmem:[#allocation6 + $0x58] sm:$0xff]
    %v146 = vld [vmem:[#allocation6 + $0x60] sm:$0xff]
    %v147 = vld [vmem:[#allocation6 + $0x68] sm:$0xff]
    %v148 = vld [vmem:[#allocation6 + $0x70] sm:$0xff]
    %v149 = vld [vmem:[#allocation6 + $0x78] sm:$0xff]
    %vm152 = vcmask 1041409
    %v153 = vsel %vm152, %v121, %v115
    %155 = vmatpush.msra.mxu0 %v149
    %156 = vmatpush.msra.mxu0 %v148
    %157 = vmatpush.msra.mxu0 %v147
    %158 = vmatpush.msra.mxu0 %v146
    %159 = vmatpush.msra.mxu0 %v145
    %160 = vmatpush.msra.mxu0 %v144
    %161 = vmatpush.msra.mxu0 %v143
    %162 = vmatpush.msra.mxu0 %v142
    %163 = vmatpush.msra.mxu0 %v141
    %164 = vmatpush.msra.mxu0 %v140
    %165 = vmatpush.msra.mxu0 %v139
    %166 = vmatpush.msra.mxu0 %v138
    %167 = vmatpush.msra.mxu0 %v137
    %168 = vmatpush.msra.mxu0 %v136
    %169 = vmatpush.msra.mxu0 %v135
    %170 = vmatpush.msra.mxu0 %v134
    %171 = vmatmul.f32.gmra.mxu0 %v153
    %v172 = vpop.f32.mrf.mxu0
    %v173 = vadd.f32 0.0, %v172
    %174 = vdwg.mxu0
    %v175 = vrcp.pop %v127
    %v176 = vmul.f32 %v127, %v175
    %v177 = vsub.f32 1.0, %v176
    %v178 = vmul.f32 %v175, %v177
    %v179 = vadd.f32 %v175, %v178
    %vm180 = vweird.f32 %v127
    %vm181 = vweird.f32 %v175
    %vm182 = vmor %vm180, %vm181
    %v183 = vsel %vm182, %v175, %v179
    %v184 = vand.u32 2147483647, %v127
    %vm185 = vcmp.eq.f32.partialorder %v184, 8.507059e+37
    %v186 = vand.u32 %v127, 2147483648
    %v187 = vor.u32 1.1754944e-38, %v186
    %v188 = vsel %vm185, %v187, %v183
    %v189 = vrcp.pop %v133
    %v190 = vmul.f32 %v133, %v189
    %v191 = vsub.f32 1.0, %v190
    %v192 = vmul.f32 %v189, %v191
    %v193 = vadd.f32 %v189, %v192
    %vm194 = vweird.f32 %v133
    %vm195 = vweird.f32 %v189
    %vm196 = vmor %vm194, %vm195
    %v197 = vsel %vm196, %v189, %v193
    %v198 = vand.u32 2147483647, %v133
    %vm199 = vcmp.eq.f32.partialorder %v198, 8.507059e+37
    %v200 = vand.u32 %v133, 2147483648
    %v201 = vor.u32 1.1754944e-38, %v200
    %v202 = vsel %vm199, %v201, %v197
    %v205 = vsel %vm152, %v202, %v188
    %v207 = vmul.f32 %v173, %v205
    %v208 = vld [vmem:[%s4] sm:$0x1]
    %v210 = vperm.slane %v208, 0
    %v212 = vadd.f32 %v207, %v210
    %213 = vst [vmem:[#allocation8] sm:$0x3] %v212
    // Predicated region
    $region30: #{tpu_custom_call.1} parent=1 // pred_check
      _
    $region31: #{tpu_custom_call.1} parent=1 // pred_check_branch
      %215 = sbr.rel (0) target = $region33
    $region32: #{tpu_custom_call.1} parent=1 // pred_region
      %217 = vsyncadd [#allocation5], 0
      %s219 = sshll.u32 [#allocation8], 4
      %s220 = int_to_ptr.vmem [resolvable:$true] %s219
      %s221 = sshll.u32 %s5, 4
      %s222 = int_to_ptr.hbm [resolvable:$true] %s221
      %224 = dma.vmem_to_hbm [thread:$0]  %s220, 32, %s222, [#allocation5]
    $region33: #{tpu_custom_call.1} parent=1 // pred_fallthru
      _
    // Predicated region
    $region34: #{tpu_custom_call.1} parent=1 // pred_check
      _
    $region35: #{tpu_custom_call.1} parent=1 // pred_check_branch
      %226 = sbr.rel (0) target = $region37
    $region36: #{tpu_custom_call.1} parent=1 // pred_region
      %228 = dma.done [#allocation5], 32
    $region37: #{tpu_custom_call.1} parent=1 // pred_fallthru
      _
    %229 = vsyncpa [#allocation4], 1
    %230 = vsyncpa [#allocation7], 1
    %231 = vsyncpa [#allocation5], 1

</llo_original>
